<compile_context>
chip_gen: v6e
topology: v6e:2x2x1
jax: 0.10.0
libtpu: 0.0.40
codegen_flags: <defaults>
</compile_context>

<pallas_src>
import functools

import jax
import jax.numpy as jnp
from jax.experimental import pallas as pl
from jax.experimental.pallas import tpu as pltpu


def _round_up(x, m):
    return ((x + m - 1) // m) * m


def _pick_tile(dim, pref, align):
    """Pick a tile for `dim`: the full dim if it fits in `pref`, otherwise the
    largest multiple-of-`align` divisor of `dim` that is <= `pref` (no padding
    needed), otherwise `pref` rounded to `align` (padding required)."""
    if dim <= pref:
        return dim
    for d in range(pref // align, 0, -1):
        cand = d * align
        if dim % cand == 0:
            return cand
    return _round_up(pref, align)


# --------------------------------------------------------------------------
# Kernels
# --------------------------------------------------------------------------
def _gemm_bn_silu_kernel(x_ref, w_ref, b_ref, o_ref):
    """Single-K-block fast path (gk == 1): no accumulator scratch.

    x_ref: (1, tk, tl)  activations / patches (f32 or bf16; cast in-kernel)
    w_ref: (tn, tk)     bf16 weight with BN scale folded in
    b_ref: (tn, 1)      f32  BN bias (beta - mean * scale)
    o_ref: (1, tn, tl)  output block (NCHW-ordered slab)
    """
    xb = x_ref[0].astype(jnp.bfloat16)
    y = jnp.dot(w_ref[...], xb, preferred_element_type=jnp.float32)
    y = y + b_ref[...]
    o_ref[0] = (y * jax.nn.sigmoid(y)).astype(o_ref.dtype)  # SiLU


def _gemm_bn_silu_kernel_acc(x_ref, w_ref, b_ref, o_ref, acc_ref):
    """Tiled-K path: f32 accumulator resident across the last grid axis."""
    @pl.when(pl.program_id(3) == 0)
    def _():
        acc_ref[...] = jnp.zeros_like(acc_ref)

    xb = x_ref[0].astype(jnp.bfloat16)
    acc_ref[...] += jnp.dot(w_ref[...], xb, preferred_element_type=jnp.float32)

    @pl.when(pl.program_id(3) == pl.num_programs(3) - 1)
    def _():
        y = acc_ref[...] + b_ref[...]                          # folded BN bias
        o_ref[0] = (y * jax.nn.sigmoid(y)).astype(o_ref.dtype)  # SiLU


# --------------------------------------------------------------------------
# Wrapper
# --------------------------------------------------------------------------
@functools.partial(jax.jit,
                   static_argnames=("k", "s", "tn", "tl", "tk", "out_dtype"))
def conv_bn_silu(x, weight, gamma, beta, running_mean, running_var,
                 *, k=1, s=1, eps=1e-5, tn=256, tl=1024, tk=1024,
                 out_dtype=None):
    """x: (N, C1, H, W) NCHW.  weight: (C2, C1, k, k) (PyTorch OIHW).

    Returns (N, C2, Ho, Wo) == SiLU(BatchNorm2d(Conv2d(..., bias=False)))
    with BatchNorm in eval mode (running stats).
    """
    N, C1, H, W = x.shape
    C2 = weight.shape[0]
    out_dtype = x.dtype if out_dtype is None else jnp.dtype(out_dtype)

    Ho = (H - k) // s + 1
    Wo = (W - k) // s + 1
    L = Ho * Wo                    # spatial positions per image
    K = C1 * k * k                 # contraction length

    # ---- glue (plain JAX) -------------------------------------------------
    if k == 1 and s == 1:
        # Zero-copy: NCHW (N, C1, H, W) -> (N, C1, H*W).  No transpose, no pad.
        xp = x.reshape(N, C1, L)
    else:
        # One fused patch-extraction op; feature order is (C1, kh, kw), which
        # matches weight.reshape(C2, C1*k*k).
        # TODO(synk): read x directly in-kernel via shifted index_maps instead
        #             of materializing the k*k-inflated patch matrix in HBM.
        xp = jax.lax.conv_general_dilated_patches(
            x, (k, k), (s, s), padding="VALID",
            dimension_numbers=("NCHW", "OIHW", "NCHW"))      # (N, C1*k*k, Ho, Wo)
        xp = xp.reshape(N, K, L)

    # Fold BN (eval mode) into the weight + a per-channel bias.
    scale = gamma / jnp.sqrt(running_var + eps)               # (C2,)
    bias = beta - running_mean * scale                        # (C2,)
    w = (weight.reshape(C2, K) * scale[:, None]).astype(jnp.bfloat16)  # (C2, K)

    # ---- tile selection ----------------------------------------------------
    tn_eff = _pick_tile(C2, tn, 8)      # sublane dim of W / out blocks
    tk_eff = _pick_tile(K, tk, 128)     # lane dim of W block when tiled
    tl_eff = _pick_tile(L, tl, 128)     # lane dim of x / out blocks when tiled

    C2_pad = _round_up(C2, tn_eff)
    K_pad = _round_up(K, tk_eff)
    L_pad = _round_up(L, tl_eff)

    gn = C2_pad // tn_eff
    gl = L_pad // tl_eff
    gk = K_pad // tk_eff

    # v7x shards the "parallel" axes over 2 TensorCores: avoid collapsing the
    # parallel grid to a single program when the spatial dim can be split for
    # free (no padding introduced).
    if N * gn * gl == 1 and L >= 256 and L % 256 == 0:
        tl_eff = L // 2
        gl = 2

    # ---- padding (only when a dim does not divide its tile) ----------------
    if C2_pad > C2:
        w = jnp.pad(w, ((0, C2_pad - C2), (0, 0)))
        bias = jnp.pad(bias, (0, C2_pad - C2))
    if K_pad > K:
        w = jnp.pad(w, ((0, 0), (0, K_pad - K)))
        xp = jnp.pad(xp, ((0, 0), (0, K_pad - K), (0, 0)))
    if L_pad > L:
        xp = jnp.pad(xp, ((0, 0), (0, 0), (0, L_pad - L)))
    bias2d = bias.reshape(C2_pad, 1).astype(jnp.float32)

    x_bytes = xp.dtype.itemsize
    o_bytes = jnp.dtype(out_dtype).itemsize

    # VMEM budget: double-buffered x / w / bias / out blocks + f32 accumulator.
    vmem_need = (2 * tk_eff * tl_eff * x_bytes
                 + 2 * tn_eff * tk_eff * 2
                 + 2 * tn_eff * 4
                 + 2 * tn_eff * tl_eff * o_bytes
                 + (tn_eff * tl_eff * 4 if gk > 1 else 0))
    # Clamp to 48 MiB so the config stays safe on v7x (64 MiB physical VMEM).
    vmem_limit = int(min(48 * 1024 * 1024,
                         max(32 * 1024 * 1024, vmem_need + (4 << 20))))

    # Bytes include re-reads: xp is re-streamed per C2 tile, w per (batch,
    # spatial) tile.
    cost = pl.CostEstimate(
        flops=2 * N * C2_pad * L_pad * K_pad,
        transcendentals=N * C2_pad * L_pad,
        bytes_accessed=(N * K_pad * L_pad * x_bytes * gn
                        + C2_pad * K_pad * 2 * N * gl
                        + C2_pad * 4
                        + N * C2_pad * L_pad * o_bytes),
    )

    out_shape = jax.ShapeDtypeStruct((N, C2_pad, L_pad), out_dtype)

    if gk == 1:
        grid = (N, gn, gl)
        kernel = _gemm_bn_silu_kernel
        in_specs = [
            pl.BlockSpec((1, tk_eff, tl_eff), lambda b, j, i: (b, 0, i)),
            pl.BlockSpec((tn_eff, tk_eff), lambda b, j, i: (j, 0)),
            pl.BlockSpec((tn_eff, 1), lambda b, j, i: (j, 0)),
        ]
        out_specs = pl.BlockSpec((1, tn_eff, tl_eff), lambda b, j, i: (b, j, i))
        scratch_shapes = []
        semantics = ("parallel", "parallel", "parallel")
    else:
        grid = (N, gn, gl, gk)
        kernel = _gemm_bn_silu_kernel_acc
        in_specs = [
            pl.BlockSpec((1, tk_eff, tl_eff), lambda b, j, i, kk: (b, kk, i)),
            pl.BlockSpec((tn_eff, tk_eff), lambda b, j, i, kk: (j, kk)),
            pl.BlockSpec((tn_eff, 1), lambda b, j, i, kk: (j, 0)),
        ]
        out_specs = pl.BlockSpec((1, tn_eff, tl_eff),
                                 lambda b, j, i, kk: (b, j, i))
        scratch_shapes = [pltpu.VMEM((tn_eff, tl_eff), jnp.float32)]
        semantics = ("parallel", "parallel", "parallel", "arbitrary")

    out = pl.pallas_call(
        kernel,
        out_shape=out_shape,
        grid_spec=pltpu.PrefetchScalarGridSpec(
            num_scalar_prefetch=0,
            grid=grid,
            in_specs=in_specs,
            out_specs=out_specs,
            scratch_shapes=scratch_shapes,
        ),
        compiler_params=pltpu.CompilerParams(
            dimension_semantics=semantics,
            vmem_limit_bytes=vmem_limit),
        cost_estimate=cost,
    )(xp, w, bias2d)

    out = out[:, :C2, :L]                 # drop padding (no-op when unpadded)
    return out.reshape(N, C2, Ho, Wo)     # free: output is already NCHW-ordered


# --------------------------------------------------------------------------
# Reference + self-test
# --------------------------------------------------------------------------
def _reference(x, weight, gamma, beta, running_mean, running_var,
               *, k=1, s=1, eps=1e-5):
    """Pure-JAX f32 reference (conv -> BN(eval) -> SiLU), NCHW."""
    y = jax.lax.conv_general_dilated(
        x, weight, window_strides=(s, s), padding="VALID",
        dimension_numbers=("NCHW", "OIHW", "NCHW"))
    scale = gamma / jnp.sqrt(running_var + eps)
    bias = beta - running_mean * scale
    y = y * scale[None, :, None, None] + bias[None, :, None, None]
    return y * jax.nn.sigmoid(y)


if __name__ == "__main__":
    key = jax.random.PRNGKey(0)

    def make_params(c1, c2, k, keys):
        kw, kg, kb, km, kv = keys
        weight = jax.random.normal(kw, (c2, c1, k, k), jnp.float32)
        weight = weight * (1.0 / (c1 * k * k) ** 0.5)
        gamma = jax.random.normal(kg, (c2,), jnp.float32) * 0.1 + 1.0
        beta = jax.random.normal(kb, (c2,), jnp.float32) * 0.1
        mean = jax.random.normal(km, (c2,), jnp.float32) * 0.1
        var = jax.random.uniform(kv, (c2,), jnp.float32, minval=0.5, maxval=1.5)
        return weight, gamma, beta, mean, var

    # Case 1: module defaults Conv(c1=4, c2=8), k=1, s=1 (zero-copy fast path,
    # gk == 1 kernel, no transpose/pad glue).
    c1, c2, k, s = 4, 8, 1, 1
    N, H, W = 2, 16, 16
    k1, k2, *pk = jax.random.split(key, 7)
    x = jax.random.normal(k1, (N, c1, H, W), jnp.float32)
    params = make_params(c1, c2, k, pk)
    out = jax.block_until_ready(conv_bn_silu(x, *params, k=k, s=s))
    ref = _reference(x, *params, k=k, s=s)
    assert out.shape == ref.shape == (N, c2, H, W)
    # bf16 MXU feeds (f32 accumulation) -> loosened tolerance vs the f32 ref.
    assert jnp.allclose(out, ref, atol=2e-2, rtol=2e-2), "case1 mismatch"

    # Case 2: k=3 conv with C1*k*k > tk -> exercises the patches path and the
    # tiled-K accumulator kernel.
    c1, c2, k, s = 128, 16, 3, 1
    N, H, W = 1, 8, 8
    k1, *pk = jax.random.split(k2, 6)
    x = jax.random.normal(k1, (N, c1, H, W), jnp.float32)
    params = make_params(c1, c2, k, pk)
    out = jax.block_until_ready(conv_bn_silu(x, *params, k=k, s=s))
    ref = _reference(x, *params, k=k, s=s)
    assert out.shape == ref.shape == (N, c2, 6, 6)
    # K ~ 1.2k bf16 accumulation -> K-scaled (looser) tolerance.
    assert jnp.allclose(out, ref, atol=5e-2, rtol=5e-2), "case2 mismatch"

    print("KERNEL_OK")
</pallas_src>

<mosaic_0001>
module attributes {stable_mosaic.version = 11 : i64} {
  func.func @_gemm_bn_silu_kernel(%arg0: i32, %arg1: i32, %arg2: i32, %arg3: memref<1x4x256xf32, #tpu.memory_space<vmem>>, %arg4: memref<8x4xbf16, #tpu.memory_space<vmem>>, %arg5: memref<8x1xf32, #tpu.memory_space<vmem>>, %arg6: memref<1x8x256xf32, #tpu.memory_space<vmem>>) attributes {dimension_semantics = [#tpu.dimension_semantics<parallel>, #tpu.dimension_semantics<parallel>, #tpu.dimension_semantics<parallel>], iteration_bounds = array<i64: 2, 1, 1>, scalar_prefetch = 0 : i64, scratch_operands = 0 : i64, tpu.core_type = #tpu.core_type<tc>, window_params = [{transform_indices = @transform_0, window_bounds = array<i64: 1, 4, 256>}, {transform_indices = @transform_1, window_bounds = array<i64: 8, 4>}, {transform_indices = @transform_2, window_bounds = array<i64: 8, 1>}, {transform_indices = @transform_3, window_bounds = array<i64: 1, 8, 256>}]} {
    %c0 = arith.constant 0 : index
    %c0_0 = arith.constant 0 : index
    %c0_1 = arith.constant 0 : index
    %0 = vector.load %arg3[%c0, %c0_0, %c0_1] : memref<1x4x256xf32, #tpu.memory_space<vmem>>, vector<1x4x256xf32>
    %1 = vector.shape_cast %0 : vector<1x4x256xf32> to vector<4x256xf32>
    %2 = arith.truncf %1 : vector<4x256xf32> to vector<4x256xbf16>
    %c0_2 = arith.constant 0 : index
    %c0_3 = arith.constant 0 : index
    %3 = vector.load %arg4[%c0_2, %c0_3] : memref<8x4xbf16, #tpu.memory_space<vmem>>, vector<8x4xbf16>
    %cst = arith.constant dense<0.000000e+00> : vector<8x256xf32>
    %4 = tpu.matmul %3, %2, %cst {dimension_numbers = #tpu.dot_dimension_numbers<[1], [0], [0], [1], [0, 0, 1, 1], [], []>} : vector<8x4xbf16>, vector<4x256xbf16>, vector<8x256xf32> -> vector<8x256xf32>
    %c0_4 = arith.constant 0 : index
    %c0_5 = arith.constant 0 : index
    %5 = vector.load %arg5[%c0_4, %c0_5] : memref<8x1xf32, #tpu.memory_space<vmem>>, vector<8x1xf32>
    %6 = vector.broadcast %5 : vector<8x1xf32> to vector<8x256xf32>
    %7 = arith.addf %4, %6 : vector<8x256xf32>
    %8 = arith.negf %7 : vector<8x256xf32>
    %9 = math.exp %8 : vector<8x256xf32>
    %cst_6 = arith.constant 1.000000e+00 : f32
    %10 = vector.broadcast %cst_6 : f32 to vector<8x256xf32>
    %11 = arith.addf %10, %9 : vector<8x256xf32>
    %12 = arith.divf %10, %11 : vector<8x256xf32>
    %13 = arith.mulf %7, %12 : vector<8x256xf32>
    %c0_7 = arith.constant 0 : index
    %c0_8 = arith.constant 0 : index
    %c0_9 = arith.constant 0 : index
    %14 = vector.load %arg6[%c0_7, %c0_8, %c0_9] : memref<1x8x256xf32, #tpu.memory_space<vmem>>, vector<1x8x256xf32>
    %15 = vector.shape_cast %14 : vector<1x8x256xf32> to vector<8x256xf32>
    %16 = vector.shape_cast %13 : vector<8x256xf32> to vector<1x8x256xf32>
    tpu.vector_store %arg6[%c0_7, %c0_8, %c0_9], %16 {strides = array<i32>} : memref<1x8x256xf32, #tpu.memory_space<vmem>>, vector<1x8x256xf32>,
    return
  }
  func.func @transform_0(%arg0: i32, %arg1: i32, %arg2: i32) -> (i32, i32, i32) {
    %c0_i32 = arith.constant 0 : i32
    %c0_i32_0 = arith.constant 0 : i32
    return %arg0, %c0_i32, %arg2 : i32, i32, i32
  }
  func.func @transform_1(%arg0: i32, %arg1: i32, %arg2: i32) -> (i32, i32) {
    %c0_i32 = arith.constant 0 : i32
    %c0_i32_0 = arith.constant 0 : i32
    return %arg1, %c0_i32 : i32, i32
  }
  func.func @transform_2(%arg0: i32, %arg1: i32, %arg2: i32) -> (i32, i32) {
    %c0_i32 = arith.constant 0 : i32
    %c0_i32_0 = arith.constant 0 : i32
    return %arg1, %c0_i32 : i32, i32
  }
  func.func @transform_3(%arg0: i32, %arg1: i32, %arg2: i32) -> (i32, i32, i32) {
    %c0_i32 = arith.constant 0 : i32
    return %arg0, %arg1, %arg2 : i32, i32, i32
  }
}

</mosaic_0001>

<llo_original>
// kernel: conv_bn_silu.1
$region0: #{conv_bn_silu.1}
  #allocation0 [shape = 'u32[]', space=smem, size = 0x4, offset = 0x4, fixed_abs, tag = 'smem constant byte address 0x4 - core index']
  #allocation1 [shape = 'u32[144,128]{1,0:T(1,128)}', space=vmem, size = 0x12000, scoped, tag = 'internal scratch']
  %s0 = inlined_call_operand.vmem [shape: f32[2,4,256], index: 0, kind: input, shape index: {}]
  %s1 = inlined_call_operand.vmem [shape: bf16[8,4], index: 1, kind: input, shape index: {}]
  %s2 = inlined_call_operand.vmem [shape: f32[8,1], index: 2, kind: input, shape index: {}]
  %s3 = inlined_call_operand.vmem [shape: f32[2,8,256], index: 3, kind: output, shape index: {}]
  %s4 = sld [smem:[#allocation0]]
  $region45: #{conv_bn_silu.1} parent=0
    _
  %s6 = ssub.s32 1, %s4
  %s7 = scalar_select 0, %s6, %s4
  loop: start=0, step=1, limit=4
  $region2: #{conv_bn_silu.1} parent=0 // loop_pre_header
    _
  $region3: #{conv_bn_silu.1} parent=0 // loop_header
    %s9 = sphi 0, %s13
    %p10 = scmp.ge.s32.totalorder %s9, 4
    %s16 = sphi 0, %s35
    %s17 = sphi 0, %s31
    %s18 = sphi 0, %s27
    %s19 = sphi 0, %s16
    %s20 = sphi 0, %s17
    %s21 = sphi 0, %s18
    %s22 = sphi 0, %s19
    %s23 = sphi 0, %s20
    %s24 = sphi 0, %s21
    %s40 = sphi 0, %s42
    %s43 = sphi 0, %s40
    %s44 = sphi 0, %s43
    %s60 = sphi 0, %s44
    %s66 = sphi 0, %s68
    %s69 = sphi 0, %s66
    %s70 = sphi 0, %s69
    %s86 = sphi 0, %s70
    %s92 = sphi 0, %s94
    %s95 = sphi 0, %s92
    %s96 = sphi 0, %s95
    %s112 = sphi 0, %s96
    %s122 = sphi 0, %s124
    %s125 = sphi 0, %s122
    %s126 = sphi 0, %s125
    %s142 = sphi 0, %s126
  $region4: #{conv_bn_silu.1} parent=0 // loop_header_branch
    %12 = sbr.rel (%p10) target = $region8
  $region5: #{conv_bn_silu.1} parent=0 // loop_body
    %s14 = ssub.s32 %s9, 1
    %s15 = ssub.s32 %s9, 2
    %s25 = sadd.s32 1, %s18
    %p26 = scmp.ge.s32.totalorder %s25, 1
    %s27 = scalar_select %p26, 0, %s25
    %s28 = sadd.s32 1, %s17
    %s29 = scalar_select %p26, %s28, %s17
    %p30 = scmp.ge.s32.totalorder %s29, 1
    %s31 = scalar_select %p30, 0, %s29
    %s32 = sadd.s32 1, %s16
    %s33 = scalar_select %p30, %s32, %s16
    %p34 = scmp.ge.s32.totalorder %s33, 2
    %s35 = scalar_select %p34, 0, %s33
    %s36 = ssub.s32 %s16, %s35
    %s37 = ssub.s32 %s18, %s27
    %s38 = sor.u32 %s36, %s37
    %p39 = scmp.eq.s32.totalorder %s38, 0
    %s41 = sadd.s32 %s40, 1
    %s42 = scalar_select %p39, %s40, %s41
    %p45 = pneg %p39
    %p46 = scmp.eq.s32.totalorder %s9, 1
    %p47 = por %p45, %p46
    %p48 = scmp.ne.s32.totalorder %s40, %s43
    %p49 = scmp.eq.s32.totalorder %s9, 0
    %p50 = por %p48, %p49
    %p51 = scmp.ne.s32.totalorder %s40, %s43
    %p52 = scmp.eq.s32.totalorder %s14, 1
    %p53 = por %p51, %p52
    %p54 = scmp.ne.s32.totalorder %s43, %s44
    %p55 = scmp.eq.s32.totalorder %s14, 0
    %p56 = por %p54, %p55
    %p57 = scmp.ne.s32.totalorder %s43, %s44
    %p58 = scmp.eq.s32.totalorder %s15, 1
    %p59 = por %p57, %p58
    %p61 = scmp.ne.s32.totalorder %s44, %s60
    %p62 = scmp.eq.s32.totalorder %s15, 0
    %p63 = por %p61, %p62
    %s64 = ssub.s32 %s17, %s31
    %p65 = scmp.eq.s32.totalorder %s64, 0
    %s67 = sadd.s32 %s66, 1
    %s68 = scalar_select %p65, %s66, %s67
    %p71 = pneg %p65
    %p72 = scmp.eq.s32.totalorder %s9, 1
    %p73 = por %p71, %p72
    %p74 = scmp.ne.s32.totalorder %s66, %s69
    %p75 = scmp.eq.s32.totalorder %s9, 0
    %p76 = por %p74, %p75
    %p77 = scmp.ne.s32.totalorder %s66, %s69
    %p78 = scmp.eq.s32.totalorder %s14, 1
    %p79 = por %p77, %p78
    %p80 = scmp.ne.s32.totalorder %s69, %s70
    %p81 = scmp.eq.s32.totalorder %s14, 0
    %p82 = por %p80, %p81
    %p83 = scmp.ne.s32.totalorder %s69, %s70
    %p84 = scmp.eq.s32.totalorder %s15, 1
    %p85 = por %p83, %p84
    %p87 = scmp.ne.s32.totalorder %s70, %s86
    %p88 = scmp.eq.s32.totalorder %s15, 0
    %p89 = por %p87, %p88
    %s90 = ssub.s32 %s17, %s31
    %p91 = scmp.eq.s32.totalorder %s90, 0
    %s93 = sadd.s32 %s92, 1
    %s94 = scalar_select %p91, %s92, %s93
    %p97 = pneg %p91
    %p98 = scmp.eq.s32.totalorder %s9, 1
    %p99 = por %p97, %p98
    %p100 = scmp.ne.s32.totalorder %s92, %s95
    %p101 = scmp.eq.s32.totalorder %s9, 0
    %p102 = por %p100, %p101
    %p103 = scmp.ne.s32.totalorder %s92, %s95
    %p104 = scmp.eq.s32.totalorder %s14, 1
    %p105 = por %p103, %p104
    %p106 = scmp.ne.s32.totalorder %s95, %s96
    %p107 = scmp.eq.s32.totalorder %s14, 0
    %p108 = por %p106, %p107
    %p109 = scmp.ne.s32.totalorder %s95, %s96
    %p110 = scmp.eq.s32.totalorder %s15, 1
    %p111 = por %p109, %p110
    %p113 = scmp.ne.s32.totalorder %s96, %s112
    %p114 = scmp.eq.s32.totalorder %s15, 0
    %p115 = por %p113, %p114
    %s116 = ssub.s32 %s16, %s35
    %s117 = ssub.s32 %s17, %s31
    %s118 = sor.u32 %s116, %s117
    %s119 = ssub.s32 %s18, %s27
    %s120 = sor.u32 %s118, %s119
    %p121 = scmp.eq.s32.totalorder %s120, 0
    %s123 = sadd.s32 %s122, 1
    %s124 = scalar_select %p121, %s122, %s123
    %p127 = pneg %p121
    %p128 = scmp.eq.s32.totalorder %s9, 1
    %p129 = por %p127, %p128
    %p130 = scmp.ne.s32.totalorder %s122, %s125
    %p131 = scmp.eq.s32.totalorder %s9, 0
    %p132 = por %p130, %p131
    %p133 = scmp.ne.s32.totalorder %s122, %s125
    %p134 = scmp.eq.s32.totalorder %s14, 1
    %p135 = por %p133, %p134
    %p136 = scmp.ne.s32.totalorder %s125, %s126
    %p137 = scmp.eq.s32.totalorder %s14, 0
    %p138 = por %p136, %p137
    %p139 = scmp.ne.s32.totalorder %s125, %s126
    %p140 = scmp.eq.s32.totalorder %s15, 1
    %p141 = por %p139, %p140
    %p143 = scmp.ne.s32.totalorder %s126, %s142
    %p144 = scmp.eq.s32.totalorder %s15, 0
    %p145 = por %p143, %p144
    %p146 = scmp.le.s32.totalorder 1, %s9
    %p147 = scmp.lt.s32.totalorder %s9, 3
    %p148 = pnand %p146, %p147
    %p149 = pneg %p148
    // Predicated region
    $region9: #{conv_bn_silu.1} parent=5 // pred_check
      _
    $region10: #{conv_bn_silu.1} parent=5 // pred_check_branch
      %151 = sbr.rel (%p148) target = $region12
    $region11: #{conv_bn_silu.1} parent=5 // pred_region
      %s152 = ssub.s32 %s9, 1
      // Predicated region
      $region13: #{conv_bn_silu.1} parent=11 // pred_check
        %p153 = pneg %p82
      $region14: #{conv_bn_silu.1} parent=11 // pred_check_branch
        %155 = sbr.rel (%p153) target = $region16
      $region15: #{conv_bn_silu.1} parent=11 // pred_region
        %p156 = scmp.lt.s32.totalorder %s20, 0
        %s157 = scalar_select %p156, %s20, 0
        %s158 = smul.addr %s157, 4
        %s159 = scalar_lea.vmem %s1, %s158
      $region16: #{conv_bn_silu.1} parent=11 // pred_fallthru
        _
      // Predicated region
      $region17: #{conv_bn_silu.1} parent=11 // pred_check
        %p160 = pneg %p108
      $region18: #{conv_bn_silu.1} parent=11 // pred_check_branch
        %162 = sbr.rel (%p160) target = $region20
      $region19: #{conv_bn_silu.1} parent=11 // pred_region
        %p163 = scmp.lt.s32.totalorder %s20, 0
        %s164 = scalar_select %p163, %s20, 0
        %s165 = smul.addr %s164, 8
        %s166 = scalar_lea.vmem %s2, %s165
      $region20: #{conv_bn_silu.1} parent=11 // pred_fallthru
        _
    $region12: #{conv_bn_silu.1} parent=5 // pred_fallthru
      _
    %p167 = scmp.lt.s32.totalorder %s9, 2
    // Predicated region
    $region21: #{conv_bn_silu.1} parent=5 // pred_check
      %p168 = pneg %p167
    $region22: #{conv_bn_silu.1} parent=5 // pred_check_branch
      %170 = sbr.rel (%p168) target = $region24
    $region23: #{conv_bn_silu.1} parent=5 // pred_region
      // Predicated region
      $region25: #{conv_bn_silu.1} parent=23 // pred_check
        %p171 = pneg %p50
      $region26: #{conv_bn_silu.1} parent=23 // pred_check_branch
        %173 = sbr.rel (%p171) target = $region28
      $region27: #{conv_bn_silu.1} parent=23 // pred_region
        %s174 = smul.u32 2, %s18
        %p175 = scmp.lt.s32.totalorder %s16, 1
        %s176 = scalar_select %p175, %s16, 1
        %p177 = scmp.lt.s32.totalorder %s174, 1
        %s178 = scalar_select %p177, %s174, 1
        %s179 = smul.addr %s176, 2
        %s180 = sadd.s32 %s178, %s179
        %s181 = smul.addr %s180, 4
        %s182 = scalar_lea.vmem %s0, %s181
        %s183 = smul.u32 2, %s18
      $region28: #{conv_bn_silu.1} parent=23 // pred_fallthru
        _
    $region24: #{conv_bn_silu.1} parent=5 // pred_fallthru
      _
    %p184 = scmp.le.s32.totalorder 1, %s9
    %p185 = scmp.lt.s32.totalorder %s9, 3
    %p186 = pnand %p184, %p185
    %p187 = pneg %p186
    // Predicated region
    $region29: #{conv_bn_silu.1} parent=5 // pred_check
      _
    $region30: #{conv_bn_silu.1} parent=5 // pred_check_branch
      %189 = sbr.rel (%p186) target = $region32
    $region31: #{conv_bn_silu.1} parent=5 // pred_region
      %s190 = ssub.s32 %s9, 1
      %s191 = smul.u32 2, %s21
      %p192 = scmp.lt.s32.totalorder %s19, 1
      %s193 = scalar_select %p192, %s19, 1
      %p194 = scmp.lt.s32.totalorder %s191, 1
      %s195 = scalar_select %p194, %s191, 1
      %s196 = smul.addr %s193, 2
      %s197 = sadd.s32 %s195, %s196
      %s198 = smul.addr %s197, 4
      %s199 = scalar_lea.vmem %s0, %s198
      %p200 = pneg %p56
      %p201 = pneg %p53
      %p202 = scmp.lt.s32.totalorder %s20, 0
      %s203 = scalar_select %p202, %s20, 0
      %s204 = smul.addr %s203, 4
      %s205 = scalar_lea.vmem %s1, %s204
      %p206 = pneg %p82
      %p207 = pneg %p79
      %p208 = scmp.lt.s32.totalorder %s20, 0
      %s209 = scalar_select %p208, %s20, 0
      %s210 = smul.addr %s209, 8
      %s211 = scalar_lea.vmem %s2, %s210
      %p212 = pneg %p108
      %p213 = pneg %p105
      %p214 = pneg %p138
      %p215 = pneg %p135
      %s216 = smul.u32 2, %s21
      %p217 = scmp.lt.s32.totalorder %s19, 1
      %s218 = scalar_select %p217, %s19, 1
      %p219 = scmp.lt.s32.totalorder %s20, 0
      %s220 = scalar_select %p219, %s20, 0
      %p221 = scmp.lt.s32.totalorder %s216, 1
      %s222 = scalar_select %p221, %s216, 1
      %s223 = smul.addr %s220, 2
      %s224 = sadd.s32 %s222, %s223
      %s225 = smul.addr %s218, 2
      %s226 = sadd.s32 %s224, %s225
      %s227 = smul.addr %s226, 8
      %s228 = scalar_lea.vmem %s3, %s227
      %s229 = smul.u32 2, %s21
      %p230 = scmp.lt.s32.totalorder %s19, 1
      %s231 = scalar_select %p230, %s19, 1
      %p232 = scmp.lt.s32.totalorder %s229, 1
      %s233 = scalar_select %p232, %s229, 1
      %s234 = smul.addr %s231, 2
      %s235 = sadd.s32 %s233, %s234
      %s236 = smul.addr %s235, 4
      %s237 = scalar_lea.vmem %s0, %s236
      %s238 = smul.u32 2, %s21
      %p239 = scmp.lt.s32.totalorder %s20, 0
      %s240 = scalar_select %p239, %s20, 0
      %s241 = smul.addr %s240, 4
      %s242 = scalar_lea.vmem %s1, %s241
      %p243 = scmp.lt.s32.totalorder %s20, 0
      %s244 = scalar_select %p243, %s20, 0
      %s245 = smul.addr %s244, 8
      %s246 = scalar_lea.vmem %s2, %s245
      %s247 = smul.u32 2, %s21
      %p248 = scmp.lt.s32.totalorder %s19, 1
      %s249 = scalar_select %p248, %s19, 1
      %p250 = scmp.lt.s32.totalorder %s20, 0
      %s251 = scalar_select %p250, %s20, 0
      %p252 = scmp.lt.s32.totalorder %s247, 1
      %s253 = scalar_select %p252, %s247, 1
      %s254 = smul.addr %s251, 2
      %s255 = sadd.s32 %s253, %s254
      %s256 = smul.addr %s249, 2
      %s257 = sadd.s32 %s255, %s256
      %s258 = smul.addr %s257, 8
      %s259 = scalar_lea.vmem %s3, %s258
      %s260 = smul.u32 2, %s21
      %v262 = vld [vmem:[%s237] sm:$0xff]
      %v264 = vcombine.high %v262, %v262
      %v266 = vpack.c.bf16 %v262, %v262
      %v267 = vpack.c.bf16 %v264, %v264
      %v268 = vld [vmem:[%s242] sm:$0xf]
      %v269 = vld [vmem:[%s246] sm:$0xff]
      %271 = vset.pattern.permute.xlu0 0
      %272 = vperm.xlu0 %271, %v269
      %v273 = vpop.permute.xlu0 %272
      %vm275 = vcmask 31744
      %v277 = vsel %vm275, %v268, 0
      %vm279 = vcmask 1041408
      %v281 = vsel %vm279, %v266, 0
      %v284 = vsel %vm279, %v267, 0
      %286 = vmatprep.subr.bf16.mxu0 0
      %287 = vmatpush1.bf16.msra.mxu0 0
      %288 = vmatprep.subr.bf16.mxu0 0
      %289 = vmatpush1.bf16.msra.mxu0 0
      %290 = vmatprep.subr.bf16.mxu0 0
      %291 = vmatpush1.bf16.msra.mxu0 0
      %292 = vmatprep.subr.bf16.mxu0 0
      %293 = vmatpush1.bf16.msra.mxu0 0
      %294 = vmatprep.subr.bf16.mxu0 0
      %295 = vmatpush1.bf16.msra.mxu0 0
      %296 = vmatprep.subr.bf16.mxu0 0
      %297 = vmatpush1.bf16.msra.mxu0 0
      %298 = vmatprep.subr.bf16.mxu0 0
      %299 = vmatpush1.bf16.msra.mxu0 0
      %300 = vmatprep.subr.bf16.mxu0 %v284
      %301 = vmatpush1.bf16.msra.mxu0 %v281
      %302 = vmatprep.subr.bf16.mxu0 0
      %303 = vmatpush2.bf16.msra.mxu0 0
      %304 = vmatprep.subr.bf16.mxu0 0
      %305 = vmatpush2.bf16.msra.mxu0 0
      %306 = vmatprep.subr.bf16.mxu0 0
      %307 = vmatpush2.bf16.msra.mxu0 0
      %308 = vmatprep.subr.bf16.mxu0 0
      %309 = vmatpush2.bf16.msra.mxu0 0
      %310 = vmatprep.subr.bf16.mxu0 0
      %311 = vmatpush2.bf16.msra.mxu0 0
      %312 = vmatprep.subr.bf16.mxu0 0
      %313 = vmatpush2.bf16.msra.mxu0 0
      %314 = vmatprep.subr.bf16.mxu0 0
      %315 = vmatpush2.bf16.msra.mxu0 0
      %316 = vmatprep.subr.bf16.mxu0 0
      %317 = vmatpush2.bf16.msra.mxu0 0
      %318 = vmatprep.mubr.bf16.mxu0 0
      %319 = vmatmul.mubr.bf16.gmra.mxu0 %v277
      %v320 = vpop.f32.mrf.mxu0
      %v321 = vadd.f32 %v273, %v320
      %v322 = vpop.f32.mrf.mxu0
      %v323 = vadd.f32 %v273, %v322
      %v324 = vpop.f32.mrf.mxu0
      %v325 = vpop.f32.mrf.mxu0
      %326 = vdwg.mxu0
      %v327 = vxor.u32 %v321, 2147483648
      %v328 = vxor.u32 %v323, 2147483648
      %v329 = vmul.f32 %v327, 1.442695
      %v330 = vpow.pop %v329
      %v331 = vmul.f32 %v328, 1.442695
      %v332 = vpow.pop %v331
      %v333 = vadd.f32 %v330, 1.0
      %v334 = vadd.f32 %v332, 1.0
      %v335 = vrcp.pop %v333
      %v336 = vmul.f32 1.0, %v335
      %v337 = vrcp.pop %v334
      %v338 = vmul.f32 1.0, %v337
      %v339 = vmul.f32 %v321, %v336
      %v340 = vmul.f32 %v323, %v338
      %341 = vst [vmem:[%s259] sm:$0xff] %v339
      %342 = vst [vmem:[%s259 + $0x8] sm:$0xff] %v340
      %s343 = smul.u32 2, %s21
      %p344 = scmp.lt.s32.totalorder %s19, 1
      %s345 = scalar_select %p344, %s19, 1
      %p346 = scmp.lt.s32.totalorder %s20, 0
      %s347 = scalar_select %p346, %s20, 0
      %p348 = scmp.lt.s32.totalorder %s343, 1
      %s349 = scalar_select %p348, %s343, 1
      %s350 = smul.addr %s347, 2
      %s351 = sadd.s32 %s349, %s350
      %s352 = smul.addr %s345, 2
      %s353 = sadd.s32 %s351, %s352
      %s354 = smul.addr %s353, 8
      %s355 = scalar_lea.vmem %s3, %s354
      // Predicated region
      $region33: #{conv_bn_silu.1} parent=31 // pred_check
        %p356 = pneg %p135
      $region34: #{conv_bn_silu.1} parent=31 // pred_check_branch
        %358 = sbr.rel (%p356) target = $region36
      $region35: #{conv_bn_silu.1} parent=31 // pred_region
        %s359 = smul.u32 2, %s21
      $region36: #{conv_bn_silu.1} parent=31 // pred_fallthru
        _
    $region32: #{conv_bn_silu.1} parent=5 // pred_fallthru
      _
    %p360 = scmp.le.s32.totalorder 2, %s9
    // Predicated region
    $region37: #{conv_bn_silu.1} parent=5 // pred_check
      %p361 = pneg %p360
    $region38: #{conv_bn_silu.1} parent=5 // pred_check_branch
      %363 = sbr.rel (%p361) target = $region40
    $region39: #{conv_bn_silu.1} parent=5 // pred_region
      %s364 = ssub.s32 %s9, 2
      // Predicated region
      $region41: #{conv_bn_silu.1} parent=39 // pred_check
        %p365 = pneg %p141
      $region42: #{conv_bn_silu.1} parent=39 // pred_check_branch
        %367 = sbr.rel (%p365) target = $region44
      $region43: #{conv_bn_silu.1} parent=39 // pred_region
        %s368 = smul.u32 2, %s24
        %p369 = scmp.lt.s32.totalorder %s22, 1
        %s370 = scalar_select %p369, %s22, 1
        %p371 = scmp.lt.s32.totalorder %s23, 0
        %s372 = scalar_select %p371, %s23, 0
        %p373 = scmp.lt.s32.totalorder %s368, 1
        %s374 = scalar_select %p373, %s368, 1
        %s375 = smul.addr %s372, 2
        %s376 = sadd.s32 %s374, %s375
        %s377 = smul.addr %s370, 2
        %s378 = sadd.s32 %s376, %s377
        %s379 = smul.addr %s378, 8
        %s380 = scalar_lea.vmem %s3, %s379
      $region44: #{conv_bn_silu.1} parent=39 // pred_fallthru
        _
    $region40: #{conv_bn_silu.1} parent=5 // pred_fallthru
      _
  $region6: #{conv_bn_silu.1} parent=0 // loop_footer
    %s13 = sadd.s32 1, %s9
  $region7: #{conv_bn_silu.1} parent=0 // loop_footer_branch
    %8 = sbr.rel target = $region3
  $region8: #{conv_bn_silu.1} parent=0 // loop_exit
    _

</llo_original>
